<compile_context>
chip_gen: v7x
topology: tpu7x:2x2x1
jax: 0.10.0
libtpu: 0.0.40
codegen_flags: <defaults>
</compile_context>

<pallas_src>
import math

import jax
import jax.numpy as jnp
from jax.experimental import pallas as pl
from jax.experimental.pallas import tpu as pltpu


def _block_linear_kernel(w_ref, x_ref, b_ref, o_ref):
    # w_ref: (tg, M, K)   weights of a group of blocks
    # x_ref: (tg, K, BN)  fused (batch * n_cols) slabs of x for those blocks
    # b_ref: (tg, M, 1)   biases (f32)
    # o_ref: (tg, M, BN)  output slabs
    y = jnp.einsum(
        "gmk,gkn->gmn", w_ref[...], x_ref[...],
        preferred_element_type=jnp.float32)
    o_ref[...] = (y + b_ref[...]).astype(o_ref.dtype)


def _block_linear_kernel_ktiled(w_ref, x_ref, b_ref, o_ref, acc_ref):
    # Same as above but with a K-reduction grid axis and an f32 accumulator.
    k = pl.program_id(1)

    @pl.when(k == 0)
    def _():
        acc_ref[...] = jnp.zeros_like(acc_ref)

    acc_ref[...] += jnp.einsum(
        "gmk,gkn->gmn", w_ref[...], x_ref[...],
        preferred_element_type=jnp.float32)

    @pl.when(k == pl.num_programs(1) - 1)
    def _():
        o_ref[...] = (acc_ref[...] + b_ref[...]).astype(o_ref.dtype)


def block_linear(x, weight, bias, *, block_k=None, compute_dtype=None):
    """BlockLinear forward.

    x:      (B, G, K, N) ; weight: (G, M, K) ; bias: (G, M, 1)
    returns (B, G, M, N) with the dtype of x.

    block_k:       optional K tile (multiple of 128) for very large K.
    compute_dtype: e.g. jnp.bfloat16 to feed the MXU in bf16 on v6e/v7x
                   (accumulation and bias add stay f32).
    """
    B, G, K, N = x.shape
    Gw, M, Kw = weight.shape
    assert Gw == G and Kw == K
    assert bias.shape == (G, M, 1)
    out_dtype = x.dtype
    BN = B * N

    # Fuse batch into the lane (last) dim: (B,G,K,N) -> (G,K,B*N).
    x2 = jnp.transpose(x, (1, 2, 0, 3)).reshape(G, K, BN)

    if compute_dtype is not None:
        x2 = x2.astype(compute_dtype)
        weight = weight.astype(compute_dtype)
    bias_f32 = bias.astype(jnp.float32)

    # Optional K tiling (only needed once per-block tiles outgrow VMEM).
    if block_k is None or block_k >= K:
        tk = K
    else:
        assert K % block_k == 0 and block_k % 128 == 0, (
            "K tiling requires a 128-aligned block_k that divides K")
        tk = block_k
    kt = K // tk

    in_bytes = jnp.dtype(x2.dtype).itemsize
    out_bytes = jnp.dtype(out_dtype).itemsize

    # Per-block VMEM footprint for one grid step (double-buffered in/out,
    # plus an f32 accumulator when the K axis is tiled).
    per_block = (2 * (M * tk + tk * BN) * in_bytes
                 + 2 * M * 4                      # bias (f32), double-buffered
                 + 2 * M * BN * out_bytes
                 + (M * BN * 4 if kt > 1 else 0))

    # Group as many blocks per grid step as fit a conservative VMEM budget
    # (big tiles amortize the per-grid-step overhead; the toy problem runs in
    # a single grid step).
    budget = 24 << 20
    tg = 1
    for d in range(1, G + 1):
        if G % d == 0 and d * per_block <= budget:
            tg = d
    gg = G // tg

    vmem_est = tg * per_block
    vmem_limit = int(1.25 * vmem_est) if vmem_est > (32 << 20) else None

    if kt == 1:
        grid = (gg,)
        in_specs = [
            pl.BlockSpec((tg, M, K), lambda g: (g, 0, 0)),
            pl.BlockSpec((tg, K, BN), lambda g: (g, 0, 0)),
            pl.BlockSpec((tg, M, 1), lambda g: (g, 0, 0)),
        ]
        out_specs = pl.BlockSpec((tg, M, BN), lambda g: (g, 0, 0))
        scratch_shapes = []
        kernel = _block_linear_kernel
        dim_sem = ("parallel",)
    else:
        grid = (gg, kt)
        in_specs = [
            pl.BlockSpec((tg, M, tk), lambda g, k: (g, 0, k)),
            pl.BlockSpec((tg, tk, BN), lambda g, k: (g, k, 0)),
            pl.BlockSpec((tg, M, 1), lambda g, k: (g, 0, 0)),
        ]
        out_specs = pl.BlockSpec((tg, M, BN), lambda g, k: (g, 0, 0))
        scratch_shapes = [pltpu.VMEM((tg, M, BN), jnp.float32)]
        kernel = _block_linear_kernel_ktiled
        dim_sem = ("parallel", "arbitrary")

    y2 = pl.pallas_call(
        kernel,
        out_shape=jax.ShapeDtypeStruct((G, M, BN), out_dtype),
        grid_spec=pltpu.PrefetchScalarGridSpec(
            num_scalar_prefetch=0,
            grid=grid,
            in_specs=in_specs,
            out_specs=out_specs,
            scratch_shapes=scratch_shapes,
        ),
        compiler_params=pltpu.CompilerParams(
            dimension_semantics=dim_sem,
            vmem_limit_bytes=vmem_limit,
        ),
    )(weight, x2, bias_f32)

    # (G, M, B*N) -> (B, G, M, N)
    return y2.reshape(G, M, B, N).transpose(2, 0, 1, 3)


def init_block_linear_params(key, in_features, out_features, blocks,
                             dtype=jnp.float32):
    """Deterministic init mirroring the PyTorch reset_parameters()."""
    # kaiming_uniform_(a=sqrt(5)) on a (blocks, out, in) tensor:
    #   fan_in = out_features * in_features ; bound = 1 / sqrt(fan_in)
    fan_in = out_features * in_features
    bound = 1.0 / math.sqrt(fan_in) if fan_in > 0 else 0.0
    kw, kb = jax.random.split(key)
    weight = jax.random.uniform(
        kw, (blocks, out_features, in_features), dtype, -bound, bound)
    bias = jax.random.uniform(
        kb, (blocks, out_features, 1), dtype, -bound, bound)
    return weight, bias


if __name__ == "__main__":
    key = jax.random.PRNGKey(0)
    k_x, k_p = jax.random.split(key)

    batch = 2
    blocks = 4
    in_features = 32
    out_features = 16
    n_cols = 8

    x = jax.random.normal(k_x, (batch, blocks, in_features, n_cols),
                          dtype=jnp.float32)
    weight, bias = init_block_linear_params(k_p, in_features, out_features,
                                            blocks)

    y = jax.block_until_ready(block_linear(x, weight, bias))

    # Reference check (plain JAX, matches torch.matmul broadcasting semantics).
    y_ref = jnp.einsum("gmk,bgkn->bgmn", weight, x) + bias[None, :, :, :]
    assert y.shape == (batch, blocks, out_features, n_cols)
    assert jnp.allclose(y, y_ref, atol=1e-5, rtol=1e-5)

    print("KERNEL_OK")
</pallas_src>

<mosaic_0001>
module attributes {stable_mosaic.version = 11 : i64} {
  func.func @_block_linear_kernel(%arg0: i32, %arg1: memref<4x16x32xf32, #tpu.memory_space<vmem>>, %arg2: memref<4x32x16xf32, #tpu.memory_space<vmem>>, %arg3: memref<4x16x1xf32, #tpu.memory_space<vmem>>, %arg4: memref<4x16x16xf32, #tpu.memory_space<vmem>>) attributes {dimension_semantics = [#tpu.dimension_semantics<parallel>], iteration_bounds = array<i64: 1>, scalar_prefetch = 0 : i64, scratch_operands = 0 : i64, tpu.core_type = #tpu.core_type<tc>, window_params = [{transform_indices = @transform_0, window_bounds = array<i64: 4, 16, 32>}, {transform_indices = @transform_1, window_bounds = array<i64: 4, 32, 16>}, {transform_indices = @transform_2, window_bounds = array<i64: 4, 16, 1>}, {transform_indices = @transform_3, window_bounds = array<i64: 4, 16, 16>}]} {
    %c0 = arith.constant 0 : index
    %c0_0 = arith.constant 0 : index
    %c0_1 = arith.constant 0 : index
    %0 = vector.load %arg1[%c0, %c0_0, %c0_1] : memref<4x16x32xf32, #tpu.memory_space<vmem>>, vector<4x16x32xf32>
    %c0_2 = arith.constant 0 : index
    %c0_3 = arith.constant 0 : index
    %c0_4 = arith.constant 0 : index
    %1 = vector.load %arg2[%c0_2, %c0_3, %c0_4] : memref<4x32x16xf32, #tpu.memory_space<vmem>>, vector<4x32x16xf32>
    "tpu.trace_start"() <{level = 10 : i32, message = "gmk,gkn->gmn"}> : () -> ()
    %cst = arith.constant dense<0.000000e+00> : vector<4x16x16xf32>
    %2 = tpu.matmul %0, %1, %cst {dimension_numbers = #tpu.dot_dimension_numbers<[2], [1], [1], [2], [0, 0, 0, 1, 1, 2], [0], [0]>} : vector<4x16x32xf32>, vector<4x32x16xf32>, vector<4x16x16xf32> -> vector<4x16x16xf32>
    "tpu.trace_stop"() : () -> ()
    %c0_5 = arith.constant 0 : index
    %c0_6 = arith.constant 0 : index
    %c0_7 = arith.constant 0 : index
    %3 = vector.load %arg3[%c0_5, %c0_6, %c0_7] : memref<4x16x1xf32, #tpu.memory_space<vmem>>, vector<4x16x1xf32>
    %4 = vector.broadcast %3 : vector<4x16x1xf32> to vector<4x16x16xf32>
    %5 = arith.addf %2, %4 : vector<4x16x16xf32>
    %c0_8 = arith.constant 0 : index
    %c0_9 = arith.constant 0 : index
    %c0_10 = arith.constant 0 : index
    %6 = vector.load %arg4[%c0_8, %c0_9, %c0_10] : memref<4x16x16xf32, #tpu.memory_space<vmem>>, vector<4x16x16xf32>
    tpu.vector_store %arg4[%c0_8, %c0_9, %c0_10], %5 {strides = array<i32>} : memref<4x16x16xf32, #tpu.memory_space<vmem>>, vector<4x16x16xf32>,
    return
  }
  func.func @transform_0(%arg0: i32) -> (i32, i32, i32) {
    %c0_i32 = arith.constant 0 : i32
    %c0_i32_0 = arith.constant 0 : i32
    %c0_i32_1 = arith.constant 0 : i32
    return %arg0, %c0_i32, %c0_i32_0 : i32, i32, i32
  }
  func.func @transform_1(%arg0: i32) -> (i32, i32, i32) {
    %c0_i32 = arith.constant 0 : i32
    %c0_i32_0 = arith.constant 0 : i32
    %c0_i32_1 = arith.constant 0 : i32
    return %arg0, %c0_i32, %c0_i32_0 : i32, i32, i32
  }
  func.func @transform_2(%arg0: i32) -> (i32, i32, i32) {
    %c0_i32 = arith.constant 0 : i32
    %c0_i32_0 = arith.constant 0 : i32
    %c0_i32_1 = arith.constant 0 : i32
    return %arg0, %c0_i32, %c0_i32_0 : i32, i32, i32
  }
  func.func @transform_3(%arg0: i32) -> (i32, i32, i32) {
    %c0_i32 = arith.constant 0 : i32
    %c0_i32_0 = arith.constant 0 : i32
    %c0_i32_1 = arith.constant 0 : i32
    return %arg0, %c0_i32, %c0_i32_0 : i32, i32, i32
  }
}

</mosaic_0001>

<llo_original>
// kernel: tpu_custom_call.1
$region0: #{tpu_custom_call.1}
  #allocation0 [shape = 'u32[]', space=smem, size = 0x4, offset = 0x4, fixed_abs, tag = 'smem constant byte address 0x4 - core index']
  #allocation1 [shape = 'u32[144,128]{1,0:T(1,128)}', space=vmem, size = 0x12000, scoped, tag = 'internal scratch']
  %s0 = inlined_call_operand.vmem [shape: f32[4,16,32], index: 0, kind: input, shape index: {}]
  %s1 = inlined_call_operand.vmem [shape: f32[4,32,16], index: 1, kind: input, shape index: {}]
  %s2 = inlined_call_operand.vmem [shape: f32[4,16,1], index: 2, kind: input, shape index: {}]
  %s3 = inlined_call_operand.hbm [shape: f32[4,16,16], index: 3, kind: output, shape index: {}]
  %s4 = sld [smem:[#allocation0]]
  $region22: #{tpu_custom_call.1} parent=0
    _
  %s6 = ssub.s32 1, %s4
  %s7 = scalar_select 0, %s6, %s4
  $region1: #{tpu_custom_call.1} parent=0
    #allocation2 [shape = 'u8[32768]{0}', space=vmem, size = 0x8000, scoped, tag = 'output window, operand 0, single buffered']
    #allocation3 [shape = 's32[1]{0}', space=sflag, size = 0x4, scoped, tag = 'scoped memory for tpu_custom_call.1']
    %8 = vsyncpa [#allocation3], 0
    // Predicated region
    $region2: #{tpu_custom_call.1} parent=1 // pred_check
      _
    $region3: #{tpu_custom_call.1} parent=1 // pred_check_branch
      %10 = sbr.rel (0) target = $region5
    $region4: #{tpu_custom_call.1} parent=1 // pred_region
      _
    $region5: #{tpu_custom_call.1} parent=1 // pred_fallthru
      _
    // Predicated region
    $region6: #{tpu_custom_call.1} parent=1 // pred_check
      _
    $region7: #{tpu_custom_call.1} parent=1 // pred_check_branch
      %12 = sbr.rel (0) target = $region9
    $region8: #{tpu_custom_call.1} parent=1 // pred_region
      _
    $region9: #{tpu_custom_call.1} parent=1 // pred_fallthru
      _
    // Predicated region
    $region10: #{tpu_custom_call.1} parent=1 // pred_check
      _
    $region11: #{tpu_custom_call.1} parent=1 // pred_check_branch
      %14 = sbr.rel (0) target = $region13
    $region12: #{tpu_custom_call.1} parent=1 // pred_region
      _
    $region13: #{tpu_custom_call.1} parent=1 // pred_fallthru
      _
    %v15 = vld [vmem:[%s0] sm:$0xff]
    %v16 = vld [vmem:[%s0 + $0x8] sm:$0xff]
    %v17 = vld [vmem:[%s0 + $0x10] sm:$0xff]
    %v18 = vld [vmem:[%s0 + $0x18] sm:$0xff]
    %v19 = vld [vmem:[%s0 + $0x20] sm:$0xff]
    %v20 = vld [vmem:[%s0 + $0x28] sm:$0xff]
    %v21 = vld [vmem:[%s0 + $0x30] sm:$0xff]
    %v22 = vld [vmem:[%s0 + $0x38] sm:$0xff]
    %v23 = vld [vmem:[%s1] sm:$0xff]
    %v24 = vld [vmem:[%s1 + $0x8] sm:$0xff]
    %v25 = vld [vmem:[%s1 + $0x10] sm:$0xff]
    %v26 = vld [vmem:[%s1 + $0x18] sm:$0xff]
    %v27 = vld [vmem:[%s1 + $0x20] sm:$0xff]
    %v28 = vld [vmem:[%s1 + $0x28] sm:$0xff]
    %v29 = vld [vmem:[%s1 + $0x30] sm:$0xff]
    %v30 = vld [vmem:[%s1 + $0x38] sm:$0xff]
    %v31 = vld [vmem:[%s1 + $0x40] sm:$0xff]
    %v32 = vld [vmem:[%s1 + $0x48] sm:$0xff]
    %v33 = vld [vmem:[%s1 + $0x50] sm:$0xff]
    %v34 = vld [vmem:[%s1 + $0x58] sm:$0xff]
    %v35 = vld [vmem:[%s1 + $0x60] sm:$0xff]
    %v36 = vld [vmem:[%s1 + $0x68] sm:$0xff]
    %v37 = vld [vmem:[%s1 + $0x70] sm:$0xff]
    %v38 = vld [vmem:[%s1 + $0x78] sm:$0xff]
    %v39 = vld [vmem:[%s2] sm:$0xff]
    %v40 = vld [vmem:[%s2 + $0x8] sm:$0xff]
    %v41 = vld [vmem:[%s2 + $0x10] sm:$0xff]
    %v42 = vld [vmem:[%s2 + $0x18] sm:$0xff]
    %v43 = vld [vmem:[%s2 + $0x20] sm:$0xff]
    %v44 = vld [vmem:[%s2 + $0x28] sm:$0xff]
    %v45 = vld [vmem:[%s2 + $0x30] sm:$0xff]
    %v46 = vld [vmem:[%s2 + $0x38] sm:$0xff]
    %48 = vset.pattern.permute.xlu0 0
    %49 = vperm.xlu0 %48, %v39
    %v50 = vpop.permute.xlu0 %49
    %53 = vset.pattern.permute.xlu0 0
    %54 = vperm.xlu0 %53, %v40
    %v55 = vpop.permute.xlu0 %54
    %58 = vset.pattern.permute.xlu0 0
    %59 = vperm.xlu0 %58, %v41
    %v60 = vpop.permute.xlu0 %59
    %63 = vset.pattern.permute.xlu0 0
    %64 = vperm.xlu0 %63, %v42
    %v65 = vpop.permute.xlu0 %64
    %68 = vset.pattern.permute.xlu0 0
    %69 = vperm.xlu0 %68, %v43
    %v70 = vpop.permute.xlu0 %69
    %73 = vset.pattern.permute.xlu0 0
    %74 = vperm.xlu0 %73, %v44
    %v75 = vpop.permute.xlu0 %74
    %78 = vset.pattern.permute.xlu0 0
    %79 = vperm.xlu0 %78, %v45
    %v80 = vpop.permute.xlu0 %79
    %83 = vset.pattern.permute.xlu0 0
    %84 = vperm.xlu0 %83, %v46
    %v85 = vpop.permute.xlu0 %84
    %vm87 = vcmask 261120
    %v89 = vsel %vm87, %v15, 0
    %v92 = vsel %vm87, %v16, 0
    %94 = vmatprep.subr.mxu0 0.0
    %95 = vmatpush1.msra.mxu0 %v23
    %96 = vmatprep.subr.mxu0 0.0
    %97 = vmatpush1.msra.mxu0 %v24
    %98 = vmatprep.subr.mxu0 0.0
    %99 = vmatpush1.msra.mxu0 %v25
    %100 = vmatprep.subr.mxu0 0.0
    %101 = vmatpush1.msra.mxu0 %v26
    %102 = vmatprep.subr.mxu0 0.0
    %103 = vmatpush1.msra.mxu0 0.0
    %104 = vmatprep.subr.mxu0 0.0
    %105 = vmatpush1.msra.mxu0 0.0
    %106 = vmatprep.subr.mxu0 0.0
    %107 = vmatpush1.msra.mxu0 0.0
    %108 = vmatprep.subr.mxu0 0.0
    %109 = vmatpush1.msra.mxu0 0.0
    %110 = vmatprep.subr.mxu0 0.0
    %111 = vmatpush1.msra.mxu0 0.0
    %112 = vmatprep.subr.mxu0 0.0
    %113 = vmatpush1.msra.mxu0 0.0
    %114 = vmatprep.subr.mxu0 0.0
    %115 = vmatpush1.msra.mxu0 0.0
    %116 = vmatprep.subr.mxu0 0.0
    %117 = vmatpush1.msra.mxu0 0.0
    %118 = vmatprep.subr.mxu0 0.0
    %119 = vmatpush1.msra.mxu0 0.0
    %120 = vmatprep.subr.mxu0 0.0
    %121 = vmatpush1.msra.mxu0 0.0
    %122 = vmatprep.subr.mxu0 0.0
    %123 = vmatpush1.msra.mxu0 0.0
    %124 = vmatprep.subr.mxu0 0.0
    %125 = vmatpush1.msra.mxu0 0.0
    %126 = vmatprep.subr.mxu0 0.0
    %127 = vmatpush1.msra.mxu0 0.0
    %128 = vmatprep.subr.mxu0 0.0
    %129 = vmatpush1.msra.mxu0 0.0
    %130 = vmatprep.subr.mxu0 0.0
    %131 = vmatpush1.msra.mxu0 0.0
    %132 = vmatprep.subr.mxu0 0.0
    %133 = vmatpush1.msra.mxu0 0.0
    %134 = vmatprep.subr.mxu0 0.0
    %135 = vmatpush1.msra.mxu0 0.0
    %136 = vmatprep.subr.mxu0 0.0
    %137 = vmatpush1.msra.mxu0 0.0
    %138 = vmatprep.subr.mxu0 0.0
    %139 = vmatpush1.msra.mxu0 0.0
    %140 = vmatprep.subr.mxu0 0.0
    %141 = vmatpush1.msra.mxu0 0.0
    %142 = vmatprep.subr.mxu0 0.0
    %143 = vmatpush1.msra.mxu0 0.0
    %144 = vmatprep.subr.mxu0 0.0
    %145 = vmatpush1.msra.mxu0 0.0
    %146 = vmatprep.subr.mxu0 0.0
    %147 = vmatpush1.msra.mxu0 0.0
    %148 = vmatprep.subr.mxu0 0.0
    %149 = vmatpush1.msra.mxu0 0.0
    %150 = vmatprep.subr.mxu0 0.0
    %151 = vmatpush1.msra.mxu0 0.0
    %152 = vmatprep.subr.mxu0 0.0
    %153 = vmatpush1.msra.mxu0 0.0
    %154 = vmatprep.subr.mxu0 0.0
    %155 = vmatpush1.msra.mxu0 0.0
    %156 = vmatprep.subr.mxu0 0.0
    %157 = vmatpush1.msra.mxu0 0.0
    %158 = vmatprep.mubr.f32.mxu0 0.0
    %159 = vmatmul.mubr.f32.gmra.mrb[0].mxu0 %v89
    %v160 = vpop.f32.mrb[0].mxu0
    %v161 = vadd.f32 %v50, %v160
    %v162 = vpop.f32.mrb[0].mxu0
    %163 = vmatprep.mubr.f32.mxu0 0.0
    %164 = vmatmul.mubr.f32.gmra.mrb[0].mxu0 %v92
    %v165 = vpop.f32.mrb[0].mxu0
    %v166 = vadd.f32 %v55, %v165
    %v167 = vpop.f32.mrb[0].mxu0
    %168 = vdwg.mxu0
    %v170 = vsel %vm87, %v17, 0
    %v173 = vsel %vm87, %v18, 0
    %175 = vmatprep.subr.mxu0 0.0
    %176 = vmatpush1.msra.mxu0 %v27
    %177 = vmatprep.subr.mxu0 0.0
    %178 = vmatpush1.msra.mxu0 %v28
    %179 = vmatprep.subr.mxu0 0.0
    %180 = vmatpush1.msra.mxu0 %v29
    %181 = vmatprep.subr.mxu0 0.0
    %182 = vmatpush1.msra.mxu0 %v30
    %183 = vmatprep.subr.mxu0 0.0
    %184 = vmatpush1.msra.mxu0 0.0
    %185 = vmatprep.subr.mxu0 0.0
    %186 = vmatpush1.msra.mxu0 0.0
    %187 = vmatprep.subr.mxu0 0.0
    %188 = vmatpush1.msra.mxu0 0.0
    %189 = vmatprep.subr.mxu0 0.0
    %190 = vmatpush1.msra.mxu0 0.0
    %191 = vmatprep.subr.mxu0 0.0
    %192 = vmatpush1.msra.mxu0 0.0
    %193 = vmatprep.subr.mxu0 0.0
    %194 = vmatpush1.msra.mxu0 0.0
    %195 = vmatprep.subr.mxu0 0.0
    %196 = vmatpush1.msra.mxu0 0.0
    %197 = vmatprep.subr.mxu0 0.0
    %198 = vmatpush1.msra.mxu0 0.0
    %199 = vmatprep.subr.mxu0 0.0
    %200 = vmatpush1.msra.mxu0 0.0
    %201 = vmatprep.subr.mxu0 0.0
    %202 = vmatpush1.msra.mxu0 0.0
    %203 = vmatprep.subr.mxu0 0.0
    %204 = vmatpush1.msra.mxu0 0.0
    %205 = vmatprep.subr.mxu0 0.0
    %206 = vmatpush1.msra.mxu0 0.0
    %207 = vmatprep.subr.mxu0 0.0
    %208 = vmatpush1.msra.mxu0 0.0
    %209 = vmatprep.subr.mxu0 0.0
    %210 = vmatpush1.msra.mxu0 0.0
    %211 = vmatprep.subr.mxu0 0.0
    %212 = vmatpush1.msra.mxu0 0.0
    %213 = vmatprep.subr.mxu0 0.0
    %214 = vmatpush1.msra.mxu0 0.0
    %215 = vmatprep.subr.mxu0 0.0
    %216 = vmatpush1.msra.mxu0 0.0
    %217 = vmatprep.subr.mxu0 0.0
    %218 = vmatpush1.msra.mxu0 0.0
    %219 = vmatprep.subr.mxu0 0.0
    %220 = vmatpush1.msra.mxu0 0.0
    %221 = vmatprep.subr.mxu0 0.0
    %222 = vmatpush1.msra.mxu0 0.0
    %223 = vmatprep.subr.mxu0 0.0
    %224 = vmatpush1.msra.mxu0 0.0
    %225 = vmatprep.subr.mxu0 0.0
    %226 = vmatpush1.msra.mxu0 0.0
    %227 = vmatprep.subr.mxu0 0.0
    %228 = vmatpush1.msra.mxu0 0.0
    %229 = vmatprep.subr.mxu0 0.0
    %230 = vmatpush1.msra.mxu0 0.0
    %231 = vmatprep.subr.mxu0 0.0
    %232 = vmatpush1.msra.mxu0 0.0
    %233 = vmatprep.subr.mxu0 0.0
    %234 = vmatpush1.msra.mxu0 0.0
    %235 = vmatprep.subr.mxu0 0.0
    %236 = vmatpush1.msra.mxu0 0.0
    %237 = vmatprep.subr.mxu0 0.0
    %238 = vmatpush1.msra.mxu0 0.0
    %239 = vmatprep.mubr.f32.mxu0 0.0
    %240 = vmatmul.mubr.f32.gmra.mrb[0].mxu0 %v170
    %v241 = vpop.f32.mrb[0].mxu0
    %v242 = vadd.f32 %v60, %v241
    %v243 = vpop.f32.mrb[0].mxu0
    %244 = vmatprep.mubr.f32.mxu0 0.0
    %245 = vmatmul.mubr.f32.gmra.mrb[0].mxu0 %v173
    %v246 = vpop.f32.mrb[0].mxu0
    %v247 = vadd.f32 %v65, %v246
    %v248 = vpop.f32.mrb[0].mxu0
    %249 = vdwg.mxu0
    %v251 = vsel %vm87, %v19, 0
    %v254 = vsel %vm87, %v20, 0
    %256 = vmatprep.subr.mxu0 0.0
    %257 = vmatpush1.msra.mxu0 %v31
    %258 = vmatprep.subr.mxu0 0.0
    %259 = vmatpush1.msra.mxu0 %v32
    %260 = vmatprep.subr.mxu0 0.0
    %261 = vmatpush1.msra.mxu0 %v33
    %262 = vmatprep.subr.mxu0 0.0
    %263 = vmatpush1.msra.mxu0 %v34
    %264 = vmatprep.subr.mxu0 0.0
    %265 = vmatpush1.msra.mxu0 0.0
    %266 = vmatprep.subr.mxu0 0.0
    %267 = vmatpush1.msra.mxu0 0.0
    %268 = vmatprep.subr.mxu0 0.0
    %269 = vmatpush1.msra.mxu0 0.0
    %270 = vmatprep.subr.mxu0 0.0
    %271 = vmatpush1.msra.mxu0 0.0
    %272 = vmatprep.subr.mxu0 0.0
    %273 = vmatpush1.msra.mxu0 0.0
    %274 = vmatprep.subr.mxu0 0.0
    %275 = vmatpush1.msra.mxu0 0.0
    %276 = vmatprep.subr.mxu0 0.0
    %277 = vmatpush1.msra.mxu0 0.0
    %278 = vmatprep.subr.mxu0 0.0
    %279 = vmatpush1.msra.mxu0 0.0
    %280 = vmatprep.subr.mxu0 0.0
    %281 = vmatpush1.msra.mxu0 0.0
    %282 = vmatprep.subr.mxu0 0.0
    %283 = vmatpush1.msra.mxu0 0.0
    %284 = vmatprep.subr.mxu0 0.0
    %285 = vmatpush1.msra.mxu0 0.0
    %286 = vmatprep.subr.mxu0 0.0
    %287 = vmatpush1.msra.mxu0 0.0
    %288 = vmatprep.subr.mxu0 0.0
    %289 = vmatpush1.msra.mxu0 0.0
    %290 = vmatprep.subr.mxu0 0.0
    %291 = vmatpush1.msra.mxu0 0.0
    %292 = vmatprep.subr.mxu0 0.0
    %293 = vmatpush1.msra.mxu0 0.0
    %294 = vmatprep.subr.mxu0 0.0
    %295 = vmatpush1.msra.mxu0 0.0
    %296 = vmatprep.subr.mxu0 0.0
    %297 = vmatpush1.msra.mxu0 0.0
    %298 = vmatprep.subr.mxu0 0.0
    %299 = vmatpush1.msra.mxu0 0.0
    %300 = vmatprep.subr.mxu0 0.0
    %301 = vmatpush1.msra.mxu0 0.0
    %302 = vmatprep.subr.mxu0 0.0
    %303 = vmatpush1.msra.mxu0 0.0
    %304 = vmatprep.subr.mxu0 0.0
    %305 = vmatpush1.msra.mxu0 0.0
    %306 = vmatprep.subr.mxu0 0.0
    %307 = vmatpush1.msra.mxu0 0.0
    %308 = vmatprep.subr.mxu0 0.0
    %309 = vmatpush1.msra.mxu0 0.0
    %310 = vmatprep.subr.mxu0 0.0
    %311 = vmatpush1.msra.mxu0 0.0
    %312 = vmatprep.subr.mxu0 0.0
    %313 = vmatpush1.msra.mxu0 0.0
    %314 = vmatprep.subr.mxu0 0.0
    %315 = vmatpush1.msra.mxu0 0.0
    %316 = vmatprep.subr.mxu0 0.0
    %317 = vmatpush1.msra.mxu0 0.0
    %318 = vmatprep.subr.mxu0 0.0
    %319 = vmatpush1.msra.mxu0 0.0
    %320 = vmatprep.mubr.f32.mxu0 0.0
    %321 = vmatmul.mubr.f32.gmra.mrb[0].mxu0 %v251
    %v322 = vpop.f32.mrb[0].mxu0
    %v323 = vadd.f32 %v70, %v322
    %v324 = vpop.f32.mrb[0].mxu0
    %325 = vmatprep.mubr.f32.mxu0 0.0
    %326 = vmatmul.mubr.f32.gmra.mrb[0].mxu0 %v254
    %v327 = vpop.f32.mrb[0].mxu0
    %v328 = vadd.f32 %v75, %v327
    %v329 = vpop.f32.mrb[0].mxu0
    %330 = vdwg.mxu0
    %v332 = vsel %vm87, %v21, 0
    %v335 = vsel %vm87, %v22, 0
    %337 = vmatprep.subr.mxu0 0.0
    %338 = vmatpush1.msra.mxu0 %v35
    %339 = vmatprep.subr.mxu0 0.0
    %340 = vmatpush1.msra.mxu0 %v36
    %341 = vmatprep.subr.mxu0 0.0
    %342 = vmatpush1.msra.mxu0 %v37
    %343 = vmatprep.subr.mxu0 0.0
    %344 = vmatpush1.msra.mxu0 %v38
    %345 = vmatprep.subr.mxu0 0.0
    %346 = vmatpush1.msra.mxu0 0.0
    %347 = vmatprep.subr.mxu0 0.0
    %348 = vmatpush1.msra.mxu0 0.0
    %349 = vmatprep.subr.mxu0 0.0
    %350 = vmatpush1.msra.mxu0 0.0
    %351 = vmatprep.subr.mxu0 0.0
    %352 = vmatpush1.msra.mxu0 0.0
    %353 = vmatprep.subr.mxu0 0.0
    %354 = vmatpush1.msra.mxu0 0.0
    %355 = vmatprep.subr.mxu0 0.0
    %356 = vmatpush1.msra.mxu0 0.0
    %357 = vmatprep.subr.mxu0 0.0
    %358 = vmatpush1.msra.mxu0 0.0
    %359 = vmatprep.subr.mxu0 0.0
    %360 = vmatpush1.msra.mxu0 0.0
    %361 = vmatprep.subr.mxu0 0.0
    %362 = vmatpush1.msra.mxu0 0.0
    %363 = vmatprep.subr.mxu0 0.0
    %364 = vmatpush1.msra.mxu0 0.0
    %365 = vmatprep.subr.mxu0 0.0
    %366 = vmatpush1.msra.mxu0 0.0
    %367 = vmatprep.subr.mxu0 0.0
    %368 = vmatpush1.msra.mxu0 0.0
    %369 = vmatprep.subr.mxu0 0.0
    %370 = vmatpush1.msra.mxu0 0.0
    %371 = vmatprep.subr.mxu0 0.0
    %372 = vmatpush1.msra.mxu0 0.0
    %373 = vmatprep.subr.mxu0 0.0
    %374 = vmatpush1.msra.mxu0 0.0
    %375 = vmatprep.subr.mxu0 0.0
    %376 = vmatpush1.msra.mxu0 0.0
    %377 = vmatprep.subr.mxu0 0.0
    %378 = vmatpush1.msra.mxu0 0.0
    %379 = vmatprep.subr.mxu0 0.0
    %380 = vmatpush1.msra.mxu0 0.0
    %381 = vmatprep.subr.mxu0 0.0
    %382 = vmatpush1.msra.mxu0 0.0
    %383 = vmatprep.subr.mxu0 0.0
    %384 = vmatpush1.msra.mxu0 0.0
    %385 = vmatprep.subr.mxu0 0.0
    %386 = vmatpush1.msra.mxu0 0.0
    %387 = vmatprep.subr.mxu0 0.0
    %388 = vmatpush1.msra.mxu0 0.0
    %389 = vmatprep.subr.mxu0 0.0
    %390 = vmatpush1.msra.mxu0 0.0
    %391 = vmatprep.subr.mxu0 0.0
    %392 = vmatpush1.msra.mxu0 0.0
    %393 = vmatprep.subr.mxu0 0.0
    %394 = vmatpush1.msra.mxu0 0.0
    %395 = vmatprep.subr.mxu0 0.0
    %396 = vmatpush1.msra.mxu0 0.0
    %397 = vmatprep.subr.mxu0 0.0
    %398 = vmatpush1.msra.mxu0 0.0
    %399 = vmatprep.subr.mxu0 0.0
    %400 = vmatpush1.msra.mxu0 0.0
    %401 = vmatprep.mubr.f32.mxu0 0.0
    %402 = vmatmul.mubr.f32.gmra.mrb[0].mxu0 %v332
    %v403 = vpop.f32.mrb[0].mxu0
    %v404 = vadd.f32 %v80, %v403
    %v405 = vpop.f32.mrb[0].mxu0
    %406 = vmatprep.mubr.f32.mxu0 0.0
    %407 = vmatmul.mubr.f32.gmra.mrb[0].mxu0 %v335
    %v408 = vpop.f32.mrb[0].mxu0
    %v409 = vadd.f32 %v85, %v408
    %v410 = vpop.f32.mrb[0].mxu0
    %411 = vdwg.mxu0
    %vm412 = vcmask 130048
    %413 = vst.msk [vmem:[#allocation2] sm:$0xff] %vm412, %v161
    %414 = vst.msk [vmem:[#allocation2 + $0x8] sm:$0xff] %vm412, %v166
    %415 = vst.msk [vmem:[#allocation2 + $0x10] sm:$0xff] %vm412, %v242
    %416 = vst.msk [vmem:[#allocation2 + $0x18] sm:$0xff] %vm412, %v247
    %417 = vst.msk [vmem:[#allocation2 + $0x20] sm:$0xff] %vm412, %v323
    %418 = vst.msk [vmem:[#allocation2 + $0x28] sm:$0xff] %vm412, %v328
    %419 = vst.msk [vmem:[#allocation2 + $0x30] sm:$0xff] %vm412, %v404
    %420 = vst.msk [vmem:[#allocation2 + $0x38] sm:$0xff] %vm412, %v409
    // Predicated region
    $region14: #{tpu_custom_call.1} parent=1 // pred_check
      _
    $region15: #{tpu_custom_call.1} parent=1 // pred_check_branch
      %422 = sbr.rel (0) target = $region17
    $region16: #{tpu_custom_call.1} parent=1 // pred_region
      %s424 = ssub.s32 1024, 1024
      %425 = vsyncadd [#allocation3], %s424
      %s426 = sshll.u32 [#allocation2], 4
      %s427 = int_to_ptr.vmem [resolvable:$true] %s426
      %432 = dma.vmem_to_hbm [thread:$0]  %s427, 1024, %s3, [#allocation3], 128, 128, 8
    $region17: #{tpu_custom_call.1} parent=1 // pred_fallthru
      _
    // Predicated region
    $region18: #{tpu_custom_call.1} parent=1 // pred_check
      _
    $region19: #{tpu_custom_call.1} parent=1 // pred_check_branch
      %434 = sbr.rel (0) target = $region21
    $region20: #{tpu_custom_call.1} parent=1 // pred_region
      %435 = dma.done [#allocation3], 1024
    $region21: #{tpu_custom_call.1} parent=1 // pred_fallthru
      _
    %436 = vsyncpa [#allocation3], 1

</llo_original>
